<compile_context>
chip_gen: v6e
topology: v6e:2x2x1
jax: 0.10.0
libtpu: 0.0.40
codegen_flags: <defaults>
</compile_context>

<pallas_src>
import jax
import jax.numpy as jnp
from jax.experimental import pallas as pl
from jax.experimental.pallas import tpu as pltpu


def layerblock_kernel(x_ref, w1_ref, w2_ref, ws_ref, tvec_ref,
                      out_ref, xpad_ref, im1_ref, im2_ref):
    # x_ref    : (Cin, L)        one input sample, PyTorch channel-major layout
    # w1_ref   : (3*Cin, Cout)   conv1 weights with BN1 scale folded in
    # w2_ref   : (3*Cout, Cout)  conv2 weights with BN2 scale folded in
    # ws_ref   : (Cin, Cout)     1x1 stride-2 shortcut weights
    # tvec_ref : (3, Cout) f32   rows: [BN1 shift, BN2 shift, shortcut bias]
    # out_ref  : (Cout, Lh)      output sample (lane-dense over Lh)
    # xpad_ref : (L+2, Cin) f32  scratch: transposed + pool-padded input
    # im1_ref  : (Lh, 3*Cin)     scratch: im2col block for conv1
    # im2_ref  : (Lh, 3*Cout)    scratch: im2col block for conv2
    cout, lh = out_ref.shape
    lpad, cin = xpad_ref.shape
    l = lpad - 2
    cdt = w1_ref.dtype
    neg = float(jnp.finfo(jnp.float32).min)   # acts as -inf for the pool pad

    # ---- transpose NCL block to (L, Cin) and pad rows for the pool --------
    xt = jnp.transpose(x_ref[...], (1, 0))                   # (L, Cin), XLU
    xpad_ref[0:1, :] = jnp.full((1, cin), neg, jnp.float32)
    xpad_ref[lpad - 1:lpad, :] = jnp.full((1, cin), neg, jnp.float32)
    xpad_ref[1:l + 1, :] = xt

    # ---- MaxPool1d(kernel=3, stride=2, padding=1) --------------------------
    p0 = xpad_ref[pl.ds(0, lh, 2), :]                        # x[2l-1]
    p1 = xpad_ref[pl.ds(1, lh, 2), :]                        # x[2l] (reused below)
    p2 = xpad_ref[pl.ds(2, lh, 2), :]                        # x[2l+1]
    h0 = jnp.maximum(jnp.maximum(p0, p1), p2)                # (Lh, Cin) f32

    # ---- Conv1d(k=3, p=1) + folded BN + ReLU as ONE matmul (K = 3*C) -------
    def conv3_bn_relu(h, im_ref, w_ref, shift_row):
        n, c = h.shape
        hb = h.astype(cdt)
        z = jnp.zeros((1, c), cdt)
        # im2col scratch: column block dk holds h[l + dk - 1] (zero padded).
        im_ref[0:1, 0:c] = z
        im_ref[1:n, 0:c] = hb[0:n - 1, :]
        im_ref[:, c:2 * c] = hb
        im_ref[0:n - 1, 2 * c:3 * c] = hb[1:n, :]
        im_ref[n - 1:n, 2 * c:3 * c] = z
        acc = jnp.dot(im_ref[...], w_ref[...],
                      preferred_element_type=jnp.float32)    # (Lh, Cout) on MXU
        return jnp.maximum(acc + shift_row, 0.0)             # BN shift + ReLU

    t1 = tvec_ref[0:1, :]
    t2 = tvec_ref[1:2, :]
    bs = tvec_ref[2:3, :]

    h1 = conv3_bn_relu(h0, im1_ref, w1_ref, t1)              # (Lh, Cout) f32
    h2 = conv3_bn_relu(h1, im2_ref, w2_ref, t2)              # (Lh, Cout) f32

    # ---- shortcut Conv1d(k=1, stride=2): operand is exactly p1 = x[:, ::2] --
    res = jnp.dot(p1.astype(cdt), ws_ref[...],
                  preferred_element_type=jnp.float32) + bs

    # Store lane-dense over Lh, directly in the PyTorch (Cout, Lh) layout.
    out_ref[...] = jnp.transpose(h2 + res, (1, 0)).astype(out_ref.dtype)


def layer_block_forward(x, params, *, compute_dtype=jnp.bfloat16, eps=1e-5):
    """x: (N, Cin, L) float32 (PyTorch NCL layout). Returns (N, Cout, Lh)."""
    N, Cin, L = x.shape
    Lh = (L - 1) // 2 + 1
    Cout = params['w1'].shape[0]

    # Fold BatchNorm (inference mode) into the conv weights / shift.
    s1 = params['g1'] / jnp.sqrt(params['rv1'] + eps)
    s2 = params['g2'] / jnp.sqrt(params['rv2'] + eps)
    t1 = (params['b1'] - params['rm1']) * s1 + params['beta1']
    t2 = (params['b2'] - params['rm2']) * s2 + params['beta2']

    # (Cout, Cin, K) -> (K*Cin, Cout); row = k*Cin + ci, matching the im2col
    # column layout used inside the kernel.
    def to_k_cin_cout(w):
        co, ci, k = w.shape
        return jnp.transpose(w, (2, 1, 0)).reshape(k * ci, co)

    w1k = to_k_cin_cout(params['w1'] * s1[:, None, None]).astype(compute_dtype)
    w2k = to_k_cin_cout(params['w2'] * s2[:, None, None]).astype(compute_dtype)
    wsk = jnp.transpose(params['ws'][:, :, 0], (1, 0)).astype(compute_dtype)
    tvec = jnp.stack([t1, t2, params['bs']], axis=0).astype(jnp.float32)

    def full_spec(arr):
        nd = arr.ndim
        return pl.BlockSpec(arr.shape, lambda n, _nd=nd: (0,) * _nd)

    return pl.pallas_call(
        layerblock_kernel,
        out_shape=jax.ShapeDtypeStruct((N, Cout, Lh), jnp.float32),
        grid=(N,),
        in_specs=[
            pl.BlockSpec((None, Cin, L), lambda n: (n, 0, 0)),   # NCL input
            full_spec(w1k), full_spec(w2k), full_spec(wsk), full_spec(tvec),
        ],
        out_specs=pl.BlockSpec((None, Cout, Lh), lambda n: (n, 0, 0)),
        scratch_shapes=[
            pltpu.VMEM((L + 2, Cin), jnp.float32),      # padded transposed input
            pltpu.VMEM((Lh, 3 * Cin), compute_dtype),   # im2col for conv1
            pltpu.VMEM((Lh, 3 * Cout), compute_dtype),  # im2col for conv2
        ],
        compiler_params=pltpu.CompilerParams(
            dimension_semantics=("parallel",)),
    )(x.astype(jnp.float32), w1k, w2k, wsk, tvec)


# ----------------------- pure-JAX reference (for checking) -----------------
def reference_forward(x, params):
    def conv1d(x, w, b, stride, padding):
        y = jax.lax.conv_general_dilated(
            x, w, (stride,), [(padding, padding)],
            dimension_numbers=('NCH', 'OIH', 'NCH'))
        return y + b[None, :, None]

    def bn(x, g, b, rm, rv, eps=1e-5):
        return ((x - rm[None, :, None]) / jnp.sqrt(rv[None, :, None] + eps)
                * g[None, :, None] + b[None, :, None])

    pooled = jax.lax.reduce_window(
        x, -jnp.inf, jax.lax.max,
        (1, 1, 3), (1, 1, 2), [(0, 0), (0, 0), (1, 1)])
    h = jax.nn.relu(bn(conv1d(pooled, params['w1'], params['b1'], 1, 1),
                       params['g1'], params['beta1'], params['rm1'], params['rv1']))
    h = jax.nn.relu(bn(conv1d(h, params['w2'], params['b2'], 1, 1),
                       params['g2'], params['beta2'], params['rm2'], params['rv2']))
    res = conv1d(x, params['ws'], params['bs'], 2, 0)
    return h + res


if __name__ == "__main__":
    N, Cin, Cout, L = 2, 4, 8, 16
    key = jax.random.PRNGKey(0)
    ks = jax.random.split(key, 20)

    x = jax.random.normal(ks[0], (N, Cin, L), jnp.float32)
    params = {
        # ConvolutionalBlock: conv1 -> bn1 -> relu -> conv2 -> bn2 -> relu
        'w1': 0.1 * jax.random.normal(ks[1], (Cout, Cin, 3), jnp.float32),
        'b1': 0.1 * jax.random.normal(ks[2], (Cout,), jnp.float32),
        'g1': 1.0 + 0.1 * jax.random.normal(ks[3], (Cout,), jnp.float32),
        'beta1': 0.1 * jax.random.normal(ks[4], (Cout,), jnp.float32),
        'rm1': 0.1 * jax.random.normal(ks[5], (Cout,), jnp.float32),
        'rv1': 1.0 + 0.1 * jnp.abs(jax.random.normal(ks[6], (Cout,), jnp.float32)),
        'w2': 0.1 * jax.random.normal(ks[7], (Cout, Cout, 3), jnp.float32),
        'b2': 0.1 * jax.random.normal(ks[8], (Cout,), jnp.float32),
        'g2': 1.0 + 0.1 * jax.random.normal(ks[9], (Cout,), jnp.float32),
        'beta2': 0.1 * jax.random.normal(ks[10], (Cout,), jnp.float32),
        'rm2': 0.1 * jax.random.normal(ks[11], (Cout,), jnp.float32),
        'rv2': 1.0 + 0.1 * jnp.abs(jax.random.normal(ks[12], (Cout,), jnp.float32)),
        # shortcut Conv1d(Cin -> Cout, k=1, stride=2)
        'ws': 0.1 * jax.random.normal(ks[13], (Cout, Cin, 1), jnp.float32),
        'bs': 0.1 * jax.random.normal(ks[14], (Cout,), jnp.float32),
    }

    y_ref = reference_forward(x, params)

    # Exact-structure check: f32 matmul path against the f32 reference.
    y_f32 = layer_block_forward(x, params, compute_dtype=jnp.float32)
    # Perf path: bf16 matmul operands with f32 accumulation.
    y_bf16 = layer_block_forward(x, params)
    jax.block_until_ready((y_ref, y_f32, y_bf16))

    Lh = (L - 1) // 2 + 1
    assert y_f32.shape == (N, Cout, Lh)
    assert y_bf16.shape == (N, Cout, Lh)
    err32 = float(jnp.max(jnp.abs(y_f32 - y_ref)))
    errbf = float(jnp.max(jnp.abs(y_bf16 - y_ref)))
    assert jnp.allclose(y_f32, y_ref, atol=5e-4, rtol=5e-4), err32
    assert jnp.allclose(y_bf16, y_ref, atol=5e-2, rtol=5e-2), errbf
    print("KERNEL_OK")
</pallas_src>

<mosaic_0001>
module attributes {stable_mosaic.version = 11 : i64} {
  func.func @layerblock_kernel(%arg0: i32, %arg1: memref<1x4x16xf32, #tpu.memory_space<vmem>>, %arg2: memref<12x8xf32, #tpu.memory_space<vmem>>, %arg3: memref<24x8xf32, #tpu.memory_space<vmem>>, %arg4: memref<4x8xf32, #tpu.memory_space<vmem>>, %arg5: memref<3x8xf32, #tpu.memory_space<vmem>>, %arg6: memref<1x8x8xf32, #tpu.memory_space<vmem>>, %arg7: memref<18x4xf32, #tpu.memory_space<vmem>>, %arg8: memref<8x12xf32, #tpu.memory_space<vmem>>, %arg9: memref<8x24xf32, #tpu.memory_space<vmem>>) attributes {dimension_semantics = [#tpu.dimension_semantics<parallel>], iteration_bounds = array<i64: 2>, scalar_prefetch = 0 : i64, scratch_operands = 3 : i64, tpu.core_type = #tpu.core_type<tc>, window_params = [{transform_indices = @transform_0, window_bounds = array<i64: 1, 4, 16>}, {pipeline_mode = #tpu.pipeline_mode<synchronous>, transform_indices = @transform_1, window_bounds = array<i64: 12, 8>}, {pipeline_mode = #tpu.pipeline_mode<synchronous>, transform_indices = @transform_2, window_bounds = array<i64: 24, 8>}, {pipeline_mode = #tpu.pipeline_mode<synchronous>, transform_indices = @transform_3, window_bounds = array<i64: 4, 8>}, {pipeline_mode = #tpu.pipeline_mode<synchronous>, transform_indices = @transform_4, window_bounds = array<i64: 3, 8>}, {transform_indices = @transform_5, window_bounds = array<i64: 1, 8, 8>}]} {
    %c0 = arith.constant 0 : index
    %c0_0 = arith.constant 0 : index
    %c0_1 = arith.constant 0 : index
    %0 = vector.load %arg1[%c0, %c0_0, %c0_1] : memref<1x4x16xf32, #tpu.memory_space<vmem>>, vector<1x4x16xf32>
    %1 = vector.shape_cast %0 : vector<1x4x16xf32> to vector<4x16xf32>
    %2 = tpu.transpose %1, [1, 0] : vector<4x16xf32> -> vector<16x4xf32>
    %cst = arith.constant -3.40282347E+38 : f32
    %3 = vector.broadcast %cst : f32 to vector<1x4xf32>
    %c0_2 = arith.constant 0 : index
    %c0_3 = arith.constant 0 : index
    %4 = vector.load %arg7[%c0_2, %c0_3] : memref<18x4xf32, #tpu.memory_space<vmem>>, vector<1x4xf32>
    tpu.vector_store %arg7[%c0_2, %c0_3], %3 {strides = array<i32>} : memref<18x4xf32, #tpu.memory_space<vmem>>, vector<1x4xf32>,
    %cst_4 = arith.constant -3.40282347E+38 : f32
    %5 = vector.broadcast %cst_4 : f32 to vector<1x4xf32>
    %c17 = arith.constant 17 : index
    %c0_5 = arith.constant 0 : index
    %6 = vector.load %arg7[%c17, %c0_5] : memref<18x4xf32, #tpu.memory_space<vmem>>, vector<1x4xf32>
    tpu.vector_store %arg7[%c17, %c0_5], %5 {strides = array<i32>} : memref<18x4xf32, #tpu.memory_space<vmem>>, vector<1x4xf32>,
    %c1 = arith.constant 1 : index
    %c0_6 = arith.constant 0 : index
    %7 = vector.load %arg7[%c1, %c0_6] : memref<18x4xf32, #tpu.memory_space<vmem>>, vector<16x4xf32>
    tpu.vector_store %arg7[%c1, %c0_6], %2 {strides = array<i32>} : memref<18x4xf32, #tpu.memory_space<vmem>>, vector<16x4xf32>,
    %c0_7 = arith.constant 0 : index
    %c0_8 = arith.constant 0 : index
    %8 = tpu.strided_load %arg7[%c0_7, %c0_8] {strides = array<i32: 2, 1>} : memref<18x4xf32, #tpu.memory_space<vmem>>, vector<8x4xf32>
    %c1_9 = arith.constant 1 : index
    %c0_10 = arith.constant 0 : index
    %9 = tpu.strided_load %arg7[%c1_9, %c0_10] {strides = array<i32: 2, 1>} : memref<18x4xf32, #tpu.memory_space<vmem>>, vector<8x4xf32>
    %c2 = arith.constant 2 : index
    %c0_11 = arith.constant 0 : index
    %10 = tpu.strided_load %arg7[%c2, %c0_11] {strides = array<i32: 2, 1>} : memref<18x4xf32, #tpu.memory_space<vmem>>, vector<8x4xf32>
    %11 = arith.maximumf %8, %9 : vector<8x4xf32>
    %12 = arith.maximumf %11, %10 : vector<8x4xf32>
    %c0_12 = arith.constant 0 : index
    %c0_13 = arith.constant 0 : index
    %13 = vector.load %arg5[%c0_12, %c0_13] : memref<3x8xf32, #tpu.memory_space<vmem>>, vector<1x8xf32>
    %c1_14 = arith.constant 1 : index
    %c0_15 = arith.constant 0 : index
    %14 = vector.load %arg5[%c1_14, %c0_15] : memref<3x8xf32, #tpu.memory_space<vmem>>, vector<1x8xf32>
    %c2_16 = arith.constant 2 : index
    %c0_17 = arith.constant 0 : index
    %15 = vector.load %arg5[%c2_16, %c0_17] : memref<3x8xf32, #tpu.memory_space<vmem>>, vector<1x8xf32>
    %cst_18 = arith.constant 0.000000e+00 : f32
    %16 = vector.broadcast %cst_18 : f32 to vector<1x4xf32>
    %c0_19 = arith.constant 0 : index
    %c0_20 = arith.constant 0 : index
    %17 = vector.load %arg8[%c0_19, %c0_20] : memref<8x12xf32, #tpu.memory_space<vmem>>, vector<1x4xf32>
    tpu.vector_store %arg8[%c0_19, %c0_20], %16 {strides = array<i32>} : memref<8x12xf32, #tpu.memory_space<vmem>>, vector<1x4xf32>,
    %18 = vector.extract_strided_slice %12 {offsets = [0, 0], sizes = [7, 4], strides = [1, 1]} : vector<8x4xf32> to vector<7x4xf32>
    %c1_21 = arith.constant 1 : index
    %c0_22 = arith.constant 0 : index
    %19 = vector.load %arg8[%c1_21, %c0_22] : memref<8x12xf32, #tpu.memory_space<vmem>>, vector<7x4xf32>
    tpu.vector_store %arg8[%c1_21, %c0_22], %18 {strides = array<i32>} : memref<8x12xf32, #tpu.memory_space<vmem>>, vector<7x4xf32>,
    %c0_23 = arith.constant 0 : index
    %c4 = arith.constant 4 : index
    %20 = vector.load %arg8[%c0_23, %c4] : memref<8x12xf32, #tpu.memory_space<vmem>>, vector<8x4xf32>
    tpu.vector_store %arg8[%c0_23, %c4], %12 {strides = array<i32>} : memref<8x12xf32, #tpu.memory_space<vmem>>, vector<8x4xf32>,
    %21 = vector.extract_strided_slice %12 {offsets = [1, 0], sizes = [7, 4], strides = [1, 1]} : vector<8x4xf32> to vector<7x4xf32>
    %c0_24 = arith.constant 0 : index
    %c8 = arith.constant 8 : index
    %22 = vector.load %arg8[%c0_24, %c8] : memref<8x12xf32, #tpu.memory_space<vmem>>, vector<7x4xf32>
    tpu.vector_store %arg8[%c0_24, %c8], %21 {strides = array<i32>} : memref<8x12xf32, #tpu.memory_space<vmem>>, vector<7x4xf32>,
    %c7 = arith.constant 7 : index
    %c8_25 = arith.constant 8 : index
    %23 = vector.load %arg8[%c7, %c8_25] : memref<8x12xf32, #tpu.memory_space<vmem>>, vector<1x4xf32>
    tpu.vector_store %arg8[%c7, %c8_25], %16 {strides = array<i32>} : memref<8x12xf32, #tpu.memory_space<vmem>>, vector<1x4xf32>,
    %c0_26 = arith.constant 0 : index
    %c0_27 = arith.constant 0 : index
    %24 = vector.load %arg8[%c0_26, %c0_27] : memref<8x12xf32, #tpu.memory_space<vmem>>, vector<8x12xf32>
    %c0_28 = arith.constant 0 : index
    %c0_29 = arith.constant 0 : index
    %25 = vector.load %arg2[%c0_28, %c0_29] : memref<12x8xf32, #tpu.memory_space<vmem>>, vector<12x8xf32>
    %cst_30 = arith.constant dense<0.000000e+00> : vector<8x8xf32>
    %26 = tpu.matmul %24, %25, %cst_30 {dimension_numbers = #tpu.dot_dimension_numbers<[1], [0], [0], [1], [0, 0, 1, 1], [], []>} : vector<8x12xf32>, vector<12x8xf32>, vector<8x8xf32> -> vector<8x8xf32>
    %27 = vector.broadcast %13 : vector<1x8xf32> to vector<8x8xf32>
    %28 = arith.addf %26, %27 : vector<8x8xf32>
    %cst_31 = arith.constant 0.000000e+00 : f32
    %29 = vector.broadcast %cst_31 : f32 to vector<8x8xf32>
    %30 = arith.maximumf %28, %29 : vector<8x8xf32>
    %cst_32 = arith.constant 0.000000e+00 : f32
    %31 = vector.broadcast %cst_32 : f32 to vector<1x8xf32>
    %c0_33 = arith.constant 0 : index
    %c0_34 = arith.constant 0 : index
    %32 = vector.load %arg9[%c0_33, %c0_34] : memref<8x24xf32, #tpu.memory_space<vmem>>, vector<1x8xf32>
    tpu.vector_store %arg9[%c0_33, %c0_34], %31 {strides = array<i32>} : memref<8x24xf32, #tpu.memory_space<vmem>>, vector<1x8xf32>,
    %33 = vector.extract_strided_slice %30 {offsets = [0, 0], sizes = [7, 8], strides = [1, 1]} : vector<8x8xf32> to vector<7x8xf32>
    %c1_35 = arith.constant 1 : index
    %c0_36 = arith.constant 0 : index
    %34 = vector.load %arg9[%c1_35, %c0_36] : memref<8x24xf32, #tpu.memory_space<vmem>>, vector<7x8xf32>
    tpu.vector_store %arg9[%c1_35, %c0_36], %33 {strides = array<i32>} : memref<8x24xf32, #tpu.memory_space<vmem>>, vector<7x8xf32>,
    %c0_37 = arith.constant 0 : index
    %c8_38 = arith.constant 8 : index
    %35 = vector.load %arg9[%c0_37, %c8_38] : memref<8x24xf32, #tpu.memory_space<vmem>>, vector<8x8xf32>
    tpu.vector_store %arg9[%c0_37, %c8_38], %30 {strides = array<i32>} : memref<8x24xf32, #tpu.memory_space<vmem>>, vector<8x8xf32>,
    %36 = vector.extract_strided_slice %30 {offsets = [1, 0], sizes = [7, 8], strides = [1, 1]} : vector<8x8xf32> to vector<7x8xf32>
    %c0_39 = arith.constant 0 : index
    %c16 = arith.constant 16 : index
    %37 = vector.load %arg9[%c0_39, %c16] : memref<8x24xf32, #tpu.memory_space<vmem>>, vector<7x8xf32>
    tpu.vector_store %arg9[%c0_39, %c16], %36 {strides = array<i32>} : memref<8x24xf32, #tpu.memory_space<vmem>>, vector<7x8xf32>,
    %c7_40 = arith.constant 7 : index
    %c16_41 = arith.constant 16 : index
    %38 = vector.load %arg9[%c7_40, %c16_41] : memref<8x24xf32, #tpu.memory_space<vmem>>, vector<1x8xf32>
    tpu.vector_store %arg9[%c7_40, %c16_41], %31 {strides = array<i32>} : memref<8x24xf32, #tpu.memory_space<vmem>>, vector<1x8xf32>,
    %c0_42 = arith.constant 0 : index
    %c0_43 = arith.constant 0 : index
    %39 = vector.load %arg9[%c0_42, %c0_43] : memref<8x24xf32, #tpu.memory_space<vmem>>, vector<8x24xf32>
    %c0_44 = arith.constant 0 : index
    %c0_45 = arith.constant 0 : index
    %40 = vector.load %arg3[%c0_44, %c0_45] : memref<24x8xf32, #tpu.memory_space<vmem>>, vector<24x8xf32>
    %cst_46 = arith.constant dense<0.000000e+00> : vector<8x8xf32>
    %41 = tpu.matmul %39, %40, %cst_46 {dimension_numbers = #tpu.dot_dimension_numbers<[1], [0], [0], [1], [0, 0, 1, 1], [], []>} : vector<8x24xf32>, vector<24x8xf32>, vector<8x8xf32> -> vector<8x8xf32>
    %42 = vector.broadcast %14 : vector<1x8xf32> to vector<8x8xf32>
    %43 = arith.addf %41, %42 : vector<8x8xf32>
    %cst_47 = arith.constant 0.000000e+00 : f32
    %44 = vector.broadcast %cst_47 : f32 to vector<8x8xf32>
    %45 = arith.maximumf %43, %44 : vector<8x8xf32>
    %c0_48 = arith.constant 0 : index
    %c0_49 = arith.constant 0 : index
    %46 = vector.load %arg4[%c0_48, %c0_49] : memref<4x8xf32, #tpu.memory_space<vmem>>, vector<4x8xf32>
    %cst_50 = arith.constant dense<0.000000e+00> : vector<8x8xf32>
    %47 = tpu.matmul %9, %46, %cst_50 {dimension_numbers = #tpu.dot_dimension_numbers<[1], [0], [0], [1], [0, 0, 1, 1], [], []>} : vector<8x4xf32>, vector<4x8xf32>, vector<8x8xf32> -> vector<8x8xf32>
    %48 = vector.broadcast %15 : vector<1x8xf32> to vector<8x8xf32>
    %49 = arith.addf %47, %48 : vector<8x8xf32>
    %50 = arith.addf %45, %49 : vector<8x8xf32>
    %51 = tpu.transpose %50, [1, 0] : vector<8x8xf32> -> vector<8x8xf32>
    %c0_51 = arith.constant 0 : index
    %c0_52 = arith.constant 0 : index
    %c0_53 = arith.constant 0 : index
    %52 = vector.load %arg6[%c0_51, %c0_52, %c0_53] : memref<1x8x8xf32, #tpu.memory_space<vmem>>, vector<1x8x8xf32>
    %53 = vector.shape_cast %52 : vector<1x8x8xf32> to vector<8x8xf32>
    %54 = vector.shape_cast %51 : vector<8x8xf32> to vector<1x8x8xf32>
    tpu.vector_store %arg6[%c0_51, %c0_52, %c0_53], %54 {strides = array<i32>} : memref<1x8x8xf32, #tpu.memory_space<vmem>>, vector<1x8x8xf32>,
    return
  }
  func.func @transform_0(%arg0: i32) -> (i32, i32, i32) {
    %c0_i32 = arith.constant 0 : i32
    %c0_i32_0 = arith.constant 0 : i32
    %c0_i32_1 = arith.constant 0 : i32
    return %arg0, %c0_i32, %c0_i32_0 : i32, i32, i32
  }
  func.func @transform_1(%arg0: i32) -> (i32, i32) {
    %c0_i32 = arith.constant 0 : i32
    %c0_i32_0 = arith.constant 0 : i32
    %c0_i32_1 = arith.constant 0 : i32
    return %c0_i32, %c0_i32_0 : i32, i32
  }
  func.func @transform_2(%arg0: i32) -> (i32, i32) {
    %c0_i32 = arith.constant 0 : i32
    %c0_i32_0 = arith.constant 0 : i32
    %c0_i32_1 = arith.constant 0 : i32
    return %c0_i32, %c0_i32_0 : i32, i32
  }
  func.func @transform_3(%arg0: i32) -> (i32, i32) {
    %c0_i32 = arith.constant 0 : i32
    %c0_i32_0 = arith.constant 0 : i32
    %c0_i32_1 = arith.constant 0 : i32
    return %c0_i32, %c0_i32_0 : i32, i32
  }
  func.func @transform_4(%arg0: i32) -> (i32, i32) {
    %c0_i32 = arith.constant 0 : i32
    %c0_i32_0 = arith.constant 0 : i32
    %c0_i32_1 = arith.constant 0 : i32
    return %c0_i32, %c0_i32_0 : i32, i32
  }
  func.func @transform_5(%arg0: i32) -> (i32, i32, i32) {
    %c0_i32 = arith.constant 0 : i32
    %c0_i32_0 = arith.constant 0 : i32
    %c0_i32_1 = arith.constant 0 : i32
    return %arg0, %c0_i32, %c0_i32_0 : i32, i32, i32
  }
}

</mosaic_0001>

<llo_original>
// kernel: tpu_custom_call.1
$region0: #{tpu_custom_call.1}
  #allocation0 [shape = 'u32[]', space=smem, size = 0x4, offset = 0x4, fixed_abs, tag = 'smem constant byte address 0x4 - core index']
  #allocation1 [shape = 'u32[144,128]{1,0:T(1,128)}', space=vmem, size = 0x12000, scoped, tag = 'internal scratch']
  #allocation2 [shape = 'f32[18,4]{1,0:T(8,128)}', space=vmem, size = 0x3000, scoped, tag = 'scratch operand']
  #allocation3 [shape = 'f32[8,12]{1,0:T(8,128)}', space=vmem, size = 0x1000, scoped, tag = 'scratch operand']
  #allocation4 [shape = 'f32[8,24]{1,0:T(8,128)}', space=vmem, size = 0x1000, scoped, tag = 'scratch operand']
  %s0 = inlined_call_operand.vmem [shape: f32[2,4,16], index: 0, kind: input, shape index: {}]
  %s1 = inlined_call_operand.vmem [shape: f32[12,8], index: 1, kind: input, shape index: {}]
  %s2 = inlined_call_operand.vmem [shape: f32[24,8], index: 2, kind: input, shape index: {}]
  %s3 = inlined_call_operand.vmem [shape: f32[4,8], index: 3, kind: input, shape index: {}]
  %s4 = inlined_call_operand.vmem [shape: f32[3,8], index: 4, kind: input, shape index: {}]
  %s5 = inlined_call_operand.hbm [shape: f32[2,8,8], index: 5, kind: output, shape index: {}]
  %s6 = sld [smem:[#allocation0]]
  $region53: #{tpu_custom_call.1} parent=0
    _
  %s8 = ssub.s32 1, %s6
  %s9 = scalar_select 0, %s8, %s6
  $region1: #{tpu_custom_call.1} parent=0
    #allocation5 [shape = 'u8[8192]{0}', space=vmem, size = 0x2000, scoped, tag = 'output window, operand 0']
    #allocation6 [shape = 's32[2]{0}', space=sflag, size = 0x8, scoped, tag = 'scoped memory for tpu_custom_call.1']
    %10 = vsyncpa [#allocation6], 0
    %s11 = scalar_lea.sflag [#allocation6], 1
    %12 = vsyncpa %s11, 0
    loop: start=0, step=1, limit=4
    $region2: #{tpu_custom_call.1} parent=1 // loop_pre_header
      _
    $region3: #{tpu_custom_call.1} parent=1 // loop_header
      %s14 = sphi 0, %s18
      %p15 = scmp.ge.s32.totalorder %s14, 4
      %s24 = sphi 0, %s26
      %s27 = sphi 0, %s24
      %s28 = sphi 0, %s27
      %s44 = sphi 0, %s28
      %s48 = sphi 0, %s48
      %s50 = sphi 0, %s48
      %s51 = sphi 0, %s50
      %s65 = sphi 0, %s51
      %s69 = sphi 0, %s69
      %s71 = sphi 0, %s69
      %s72 = sphi 0, %s71
      %s86 = sphi 0, %s72
      %s90 = sphi 0, %s90
      %s92 = sphi 0, %s90
      %s93 = sphi 0, %s92
      %s107 = sphi 0, %s93
      %s111 = sphi 0, %s111
      %s113 = sphi 0, %s111
      %s114 = sphi 0, %s113
      %s128 = sphi 0, %s114
      %s134 = sphi 0, %s136
      %s137 = sphi 0, %s134
      %s138 = sphi 0, %s137
      %s154 = sphi 0, %s138
    $region4: #{tpu_custom_call.1} parent=1 // loop_header_branch
      %17 = sbr.rel (%p15) target = $region8
    $region5: #{tpu_custom_call.1} parent=1 // loop_body
      %s19 = ssub.s32 %s14, 1
      %s20 = ssub.s32 %s14, 2
      %s21 = sadd.s32 %s14, 1
      %s22 = ssub.s32 %s14, %s21
      %p23 = scmp.eq.s32.totalorder %s22, 0
      %s25 = sadd.s32 %s24, 1
      %s26 = scalar_select %p23, %s24, %s25
      %p29 = pneg %p23
      %p30 = scmp.eq.s32.totalorder %s14, 1
      %p31 = por %p29, %p30
      %p32 = scmp.ne.s32.totalorder %s24, %s27
      %p33 = scmp.eq.s32.totalorder %s14, 0
      %p34 = por %p32, %p33
      %p35 = scmp.ne.s32.totalorder %s24, %s27
      %p36 = scmp.eq.s32.totalorder %s19, 1
      %p37 = por %p35, %p36
      %p38 = scmp.ne.s32.totalorder %s27, %s28
      %p39 = scmp.eq.s32.totalorder %s19, 0
      %p40 = por %p38, %p39
      %p41 = scmp.ne.s32.totalorder %s27, %s28
      %p42 = scmp.eq.s32.totalorder %s20, 1
      %p43 = por %p41, %p42
      %p45 = scmp.ne.s32.totalorder %s28, %s44
      %p46 = scmp.eq.s32.totalorder %s20, 0
      %p47 = por %p45, %p46
      %s49 = sadd.s32 %s48, 1
      %p52 = scmp.eq.s32.totalorder %s14, 1
      %p53 = scmp.ne.s32.totalorder %s48, %s50
      %p54 = scmp.eq.s32.totalorder %s14, 0
      %p55 = por %p53, %p54
      %p56 = scmp.ne.s32.totalorder %s48, %s50
      %p57 = scmp.eq.s32.totalorder %s19, 1
      %p58 = por %p56, %p57
      %p59 = scmp.ne.s32.totalorder %s50, %s51
      %p60 = scmp.eq.s32.totalorder %s19, 0
      %p61 = por %p59, %p60
      %p62 = scmp.ne.s32.totalorder %s50, %s51
      %p63 = scmp.eq.s32.totalorder %s20, 1
      %p64 = por %p62, %p63
      %p66 = scmp.ne.s32.totalorder %s51, %s65
      %p67 = scmp.eq.s32.totalorder %s20, 0
      %p68 = por %p66, %p67
      %s70 = sadd.s32 %s69, 1
      %p73 = scmp.eq.s32.totalorder %s14, 1
      %p74 = scmp.ne.s32.totalorder %s69, %s71
      %p75 = scmp.eq.s32.totalorder %s14, 0
      %p76 = por %p74, %p75
      %p77 = scmp.ne.s32.totalorder %s69, %s71
      %p78 = scmp.eq.s32.totalorder %s19, 1
      %p79 = por %p77, %p78
      %p80 = scmp.ne.s32.totalorder %s71, %s72
      %p81 = scmp.eq.s32.totalorder %s19, 0
      %p82 = por %p80, %p81
      %p83 = scmp.ne.s32.totalorder %s71, %s72
      %p84 = scmp.eq.s32.totalorder %s20, 1
      %p85 = por %p83, %p84
      %p87 = scmp.ne.s32.totalorder %s72, %s86
      %p88 = scmp.eq.s32.totalorder %s20, 0
      %p89 = por %p87, %p88
      %s91 = sadd.s32 %s90, 1
      %p94 = scmp.eq.s32.totalorder %s14, 1
      %p95 = scmp.ne.s32.totalorder %s90, %s92
      %p96 = scmp.eq.s32.totalorder %s14, 0
      %p97 = por %p95, %p96
      %p98 = scmp.ne.s32.totalorder %s90, %s92
      %p99 = scmp.eq.s32.totalorder %s19, 1
      %p100 = por %p98, %p99
      %p101 = scmp.ne.s32.totalorder %s92, %s93
      %p102 = scmp.eq.s32.totalorder %s19, 0
      %p103 = por %p101, %p102
      %p104 = scmp.ne.s32.totalorder %s92, %s93
      %p105 = scmp.eq.s32.totalorder %s20, 1
      %p106 = por %p104, %p105
      %p108 = scmp.ne.s32.totalorder %s93, %s107
      %p109 = scmp.eq.s32.totalorder %s20, 0
      %p110 = por %p108, %p109
      %s112 = sadd.s32 %s111, 1
      %p115 = scmp.eq.s32.totalorder %s14, 1
      %p116 = scmp.ne.s32.totalorder %s111, %s113
      %p117 = scmp.eq.s32.totalorder %s14, 0
      %p118 = por %p116, %p117
      %p119 = scmp.ne.s32.totalorder %s111, %s113
      %p120 = scmp.eq.s32.totalorder %s19, 1
      %p121 = por %p119, %p120
      %p122 = scmp.ne.s32.totalorder %s113, %s114
      %p123 = scmp.eq.s32.totalorder %s19, 0
      %p124 = por %p122, %p123
      %p125 = scmp.ne.s32.totalorder %s113, %s114
      %p126 = scmp.eq.s32.totalorder %s20, 1
      %p127 = por %p125, %p126
      %p129 = scmp.ne.s32.totalorder %s114, %s128
      %p130 = scmp.eq.s32.totalorder %s20, 0
      %p131 = por %p129, %p130
      %s132 = ssub.s32 %s14, %s21
      %p133 = scmp.eq.s32.totalorder %s132, 0
      %s135 = sadd.s32 %s134, 1
      %s136 = scalar_select %p133, %s134, %s135
      %p139 = pneg %p133
      %p140 = scmp.eq.s32.totalorder %s14, 1
      %p141 = por %p139, %p140
      %p142 = scmp.ne.s32.totalorder %s134, %s137
      %p143 = scmp.eq.s32.totalorder %s14, 0
      %p144 = por %p142, %p143
      %p145 = scmp.ne.s32.totalorder %s134, %s137
      %p146 = scmp.eq.s32.totalorder %s19, 1
      %p147 = por %p145, %p146
      %p148 = scmp.ne.s32.totalorder %s137, %s138
      %p149 = scmp.eq.s32.totalorder %s19, 0
      %p150 = por %p148, %p149
      %p151 = scmp.ne.s32.totalorder %s137, %s138
      %p152 = scmp.eq.s32.totalorder %s20, 1
      %p153 = por %p151, %p152
      %p155 = scmp.ne.s32.totalorder %s138, %s154
      %p156 = scmp.eq.s32.totalorder %s20, 0
      %p157 = por %p155, %p156
      %p158 = scmp.le.s32.totalorder 1, %s14
      %p159 = scmp.lt.s32.totalorder %s14, 3
      %p160 = pnand %p158, %p159
      %p161 = pneg %p160
      // Predicated region
      $region9: #{tpu_custom_call.1} parent=5 // pred_check
        _
      $region10: #{tpu_custom_call.1} parent=5 // pred_check_branch
        %163 = sbr.rel (%p160) target = $region12
      $region11: #{tpu_custom_call.1} parent=5 // pred_region
        %s164 = ssub.s32 %s14, 1
        // Predicated region
        $region13: #{tpu_custom_call.1} parent=11 // pred_check
          %p165 = pneg %p61
        $region14: #{tpu_custom_call.1} parent=11 // pred_check_branch
          %167 = sbr.rel (%p165) target = $region16
        $region15: #{tpu_custom_call.1} parent=11 // pred_region
          _
        $region16: #{tpu_custom_call.1} parent=11 // pred_fallthru
          _
        // Predicated region
        $region17: #{tpu_custom_call.1} parent=11 // pred_check
          %p168 = pneg %p82
        $region18: #{tpu_custom_call.1} parent=11 // pred_check_branch
          %170 = sbr.rel (%p168) target = $region20
        $region19: #{tpu_custom_call.1} parent=11 // pred_region
          _
        $region20: #{tpu_custom_call.1} parent=11 // pred_fallthru
          _
        // Predicated region
        $region21: #{tpu_custom_call.1} parent=11 // pred_check
          %p171 = pneg %p103
        $region22: #{tpu_custom_call.1} parent=11 // pred_check_branch
          %173 = sbr.rel (%p171) target = $region24
        $region23: #{tpu_custom_call.1} parent=11 // pred_region
          _
        $region24: #{tpu_custom_call.1} parent=11 // pred_fallthru
          _
        // Predicated region
        $region25: #{tpu_custom_call.1} parent=11 // pred_check
          %p174 = pneg %p124
        $region26: #{tpu_custom_call.1} parent=11 // pred_check_branch
          %176 = sbr.rel (%p174) target = $region28
        $region27: #{tpu_custom_call.1} parent=11 // pred_region
          _
        $region28: #{tpu_custom_call.1} parent=11 // pred_fallthru
          _
      $region12: #{tpu_custom_call.1} parent=5 // pred_fallthru
        _
      %p177 = scmp.lt.s32.totalorder %s14, 2
      // Predicated region
      $region29: #{tpu_custom_call.1} parent=5 // pred_check
        %p178 = pneg %p177
      $region30: #{tpu_custom_call.1} parent=5 // pred_check_branch
        %180 = sbr.rel (%p178) target = $region32
      $region31: #{tpu_custom_call.1} parent=5 // pred_region
        // Predicated region
        $region33: #{tpu_custom_call.1} parent=31 // pred_check
          %p181 = pneg %p34
        $region34: #{tpu_custom_call.1} parent=31 // pred_check_branch
          %183 = sbr.rel (%p181) target = $region36
        $region35: #{tpu_custom_call.1} parent=31 // pred_region
          %p184 = scmp.lt.s32.totalorder %s14, 1
          %s185 = scalar_select %p184, %s14, 1
          %s186 = smul.addr %s185, 4
          %s187 = scalar_lea.vmem %s0, %s186
        $region36: #{tpu_custom_call.1} parent=31 // pred_fallthru
          _
      $region32: #{tpu_custom_call.1} parent=5 // pred_fallthru
        _
      %p188 = scmp.le.s32.totalorder 1, %s14
      %p189 = scmp.lt.s32.totalorder %s14, 3
      %p190 = pnand %p188, %p189
      %p191 = pneg %p190
      // Predicated region
      $region37: #{tpu_custom_call.1} parent=5 // pred_check
        _
      $region38: #{tpu_custom_call.1} parent=5 // pred_check_branch
        %193 = sbr.rel (%p190) target = $region40
      $region39: #{tpu_custom_call.1} parent=5 // pred_region
        %s194 = ssub.s32 %s14, 1
        %p195 = scmp.lt.s32.totalorder %s19, 1
        %s196 = scalar_select %p195, %s19, 1
        %s197 = smul.addr %s196, 4
        %s198 = scalar_lea.vmem %s0, %s197
        %p199 = pneg %p40
        %p200 = pneg %p37
        %p201 = pneg %p61
        %p202 = pneg %p58
        %p203 = pneg %p82
        %p204 = pneg %p79
        %p205 = pneg %p103
        %p206 = pneg %p100
        %p207 = pneg %p124
        %p208 = pneg %p121
        %p209 = pneg %p150
        %p210 = pneg %p147
        %s211 = sand.u32 %s137, 1
        %s212 = scalar_lea.sflag [#allocation6], %s211
        %s213 = sand.u32 %s137, 1
        %s214 = smul.addr %s213, 8
        %s215 = scalar_lea.vmem [#allocation5], %s214
        %p216 = scmp.lt.s32.totalorder %s19, 1
        %s217 = scalar_select %p216, %s19, 1
        %s218 = smul.addr %s217, 4
        %s219 = scalar_lea.vmem %s0, %s218
        %v220 = vld [vmem:[%s219] sm:$0xf]
        %221 = vxpose.xlu0.b32.start [1/16] %v220, 128
        %222 = vxpose.xlu0.b32.cont [2/16] 0.0, 128
        %223 = vxpose.xlu0.b32.cont [3/16] 0.0, 128
        %224 = vxpose.xlu0.b32.cont [4/16] 0.0, 128
        %225 = vxpose.xlu0.b32.cont [5/16] 0.0, 128
        %226 = vxpose.xlu0.b32.cont [6/16] 0.0, 128
        %227 = vxpose.xlu0.b32.cont [7/16] 0.0, 128
        %228 = vxpose.xlu0.b32.cont [8/16] 0.0, 128
        %229 = vxpose.xlu0.b32.cont [9/16] 0.0, 128
        %230 = vxpose.xlu0.b32.cont [10/16] 0.0, 128
        %231 = vxpose.xlu0.b32.cont [11/16] 0.0, 128
        %232 = vxpose.xlu0.b32.cont [12/16] 0.0, 128
        %233 = vxpose.xlu0.b32.cont [13/16] 0.0, 128
        %234 = vxpose.xlu0.b32.cont [14/16] 0.0, 128
        %235 = vxpose.xlu0.b32.cont [15/16] 0.0, 128
        %236 = vxpose.xlu0.b32.end [16/16] 0.0, 128
        %v237 = vpop.trf.xlu0
        %v238 = vpop.trf.xlu0
        %v239 = vpop.trf.xlu0
        %v240 = vpop.trf.xlu0
        %v241 = vpop.trf.xlu0
        %v242 = vpop.trf.xlu0
        %v243 = vpop.trf.xlu0
        %v244 = vpop.trf.xlu0
        %v245 = vpop.trf.xlu0
        %v246 = vpop.trf.xlu0
        %v247 = vpop.trf.xlu0
        %v248 = vpop.trf.xlu0
        %v249 = vpop.trf.xlu0
        %v250 = vpop.trf.xlu0
        %v251 = vpop.trf.xlu0
        %v252 = vpop.trf.xlu0
        %vm253 = vcmask 24576
        %254 = vst.msk [vmem:[#allocation2] sm:$0x1] %vm253, -3.4028235e+38
        %255 = vst.msk [vmem:[#allocation2 + $0x11] sm:$0x1] %vm253, -3.4028235e+38
        %vm256 = vcmask 31744
        %257 = vst.msk [vmem:[#allocation2 + $0x1] sm:$0xff] %vm256, %v237
        %258 = vst.msk [vmem:[#allocation2 + $0x9] sm:$0xff] %vm256, %v238
        %v259 = vld [vmem:[#allocation2] ss:$2 sm:$0xff]
        %s260 = scalar_lea.vmem [#allocation2], 1
        %v261 = vld [vmem:[%s260] ss:$2 sm:$0xff]
        %s262 = scalar_lea.vmem [#allocation2], 2
        %v263 = vld [vmem:[%s262] ss:$2 sm:$0xff]
        %v264 = vmax.f32 %v259, %v261
        %v265 = vmax.f32 %v264, %v263
        %v266 = vld [vmem:[%s4] sm:$0x1]
        %v267 = vld [vmem:[%s4 + $0x1] sm:$0x1]
        %v268 = vld [vmem:[%s4 + $0x2] sm:$0x1]
        %269 = vst.msk [vmem:[#allocation3] sm:$0x1] %vm253, 0.0
        %vm270 = vcmask 30720
        %271 = vst.msk [vmem:[#allocation3 + $0x1] sm:$0x7f] %vm270, %v265
        %273 = vrot.lane.b32.xlu0 %v265, 4
        %v274 = vpop.permute.xlu0 %273
        %vm276 = vcmask 64544
        %277 = vst.msk [vmem:[#allocation3] sm:$0xff] %vm276, %v274
        %278 = vrot.lane.b32.xlu0 %v265, 8
        %v279 = vpop.permute.xlu0 %278
        %vm281 = vcmask 97345
        %282 = vst.msk [vmem:[#allocation3 - $0x1] sm:$0xfe] %vm281, %v279
        %vm283 = vcmask 90176
        %284 = vst.msk [vmem:[#allocation3 + $0x7] sm:$0x1] %vm283, 0.0
        %v285 = vld [vmem:[#allocation3] sm:$0xff]
        %v286 = vld [vmem:[%s1] sm:$0xff]
        %v287 = vld [vmem:[%s1 + $0x8] sm:$0xf]
        %v288 = vlaneseq
        %v289 = vshrl.u32 %v288, 7
        %v290 = vsub.s32 0, %v289
        %v291 = vrot.slane %v266, %v290
        %vm292 = vcmask 97280
        %v294 = vsel %vm292, %v285, 0
        %vm296 = vcmask 1043456
        %v298 = vsel %vm296, %v287, 0
        %300 = vmatprep.subr.mxu0 0.0
        %301 = vmatpush1.msra.mxu0 0.0
        %302 = vmatprep.subr.mxu0 0.0
        %303 = vmatpush1.msra.mxu0 0.0
        %304 = vmatprep.subr.mxu0 0.0
        %305 = vmatpush1.msra.mxu0 0.0
        %306 = vmatprep.subr.mxu0 0.0
        %307 = vmatpush1.msra.mxu0 0.0
        %308 = vmatprep.subr.mxu0 0.0
        %309 = vmatpush1.msra.mxu0 0.0
        %310 = vmatprep.subr.mxu0 0.0
        %311 = vmatpush1.msra.mxu0 0.0
        %312 = vmatprep.subr.mxu0 0.0
        %313 = vmatpush1.msra.mxu0 0.0
        %314 = vmatprep.subr.mxu0 0.0
        %315 = vmatpush1.msra.mxu0 0.0
        %316 = vmatprep.subr.mxu0 0.0
        %317 = vmatpush1.msra.mxu0 0.0
        %318 = vmatprep.subr.mxu0 0.0
        %319 = vmatpush1.msra.mxu0 0.0
        %320 = vmatprep.subr.mxu0 0.0
        %321 = vmatpush1.msra.mxu0 0.0
        %322 = vmatprep.subr.mxu0 0.0
        %323 = vmatpush1.msra.mxu0 0.0
        %324 = vmatprep.subr.mxu0 0.0
        %325 = vmatpush1.msra.mxu0 0.0
        %326 = vmatprep.subr.mxu0 0.0
        %327 = vmatpush1.msra.mxu0 0.0
        %328 = vmatprep.subr.mxu0 0.0
        %329 = vmatpush1.msra.mxu0 %v298
        %330 = vmatprep.subr.mxu0 0.0
        %331 = vmatpush1.msra.mxu0 %v286
        %332 = vmatprep.subr.mxu0 0.0
        %333 = vmatpush2.msra.mxu0 0.0
        %334 = vmatprep.subr.mxu0 0.0
        %335 = vmatpush2.msra.mxu0 0.0
        %336 = vmatprep.subr.mxu0 0.0
        %337 = vmatpush2.msra.mxu0 0.0
        %338 = vmatprep.subr.mxu0 0.0
        %339 = vmatpush2.msra.mxu0 0.0
        %340 = vmatprep.subr.mxu0 0.0
        %341 = vmatpush2.msra.mxu0 0.0
        %342 = vmatprep.subr.mxu0 0.0
        %343 = vmatpush2.msra.mxu0 0.0
        %344 = vmatprep.subr.mxu0 0.0
        %345 = vmatpush2.msra.mxu0 0.0
        %346 = vmatprep.subr.mxu0 0.0
        %347 = vmatpush2.msra.mxu0 0.0
        %348 = vmatprep.subr.mxu0 0.0
        %349 = vmatpush2.msra.mxu0 0.0
        %350 = vmatprep.subr.mxu0 0.0
        %351 = vmatpush2.msra.mxu0 0.0
        %352 = vmatprep.subr.mxu0 0.0
        %353 = vmatpush2.msra.mxu0 0.0
        %354 = vmatprep.subr.mxu0 0.0
        %355 = vmatpush2.msra.mxu0 0.0
        %356 = vmatprep.subr.mxu0 0.0
        %357 = vmatpush2.msra.mxu0 0.0
        %358 = vmatprep.subr.mxu0 0.0
        %359 = vmatpush2.msra.mxu0 0.0
        %360 = vmatprep.subr.mxu0 0.0
        %361 = vmatpush2.msra.mxu0 0.0
        %362 = vmatprep.subr.mxu0 0.0
        %363 = vmatpush2.msra.mxu0 0.0
        %364 = vmatprep.mubr.f32.mxu0 0.0
        %365 = vmatmul.mubr.f32.gmra.mxu0 %v294
        %v366 = vpop.f32.mrf.mxu0
        %v367 = vadd.f32 %v291, %v366
        %v368 = vpop.f32.mrf.mxu0
        %369 = vdwg.mxu0
        %v370 = vmax.f32 %v367, 0.0
        %vm371 = vcmask 57344
        %372 = vst.msk [vmem:[#allocation4] sm:$0x1] %vm371, 0.0
        %vm373 = vcmask 63488
        %374 = vst.msk [vmem:[#allocation4 + $0x1] sm:$0x7f] %vm373, %v370
        %376 = vrot.lane.b32.xlu0 %v370, 8
        %v377 = vpop.permute.xlu0 %376
        %vm379 = vcmask 130112
        %380 = vst.msk [vmem:[#allocation4] sm:$0xff] %vm379, %v377
        %381 = vrot.lane.b32.xlu0 %v370, 16
        %v382 = vpop.permute.xlu0 %381
        %vm384 = vcmask 195713
        %385 = vst.msk [vmem:[#allocation4 - $0x1] sm:$0xfe] %vm384, %v382
        %vm386 = vcmask 188544
        %387 = vst.msk [vmem:[#allocation4 + $0x7] sm:$0x1] %vm386, 0.0
        %v388 = vld [vmem:[#allocation4] sm:$0xff]
        %v389 = vld [vmem:[%s2] sm:$0xff]
        %v390 = vld [vmem:[%s2 + $0x8] sm:$0xff]
        %v391 = vld [vmem:[%s2 + $0x10] sm:$0xff]
        %v392 = vlaneseq
        %v393 = vshrl.u32 %v392, 7
        %v394 = vsub.s32 0, %v393
        %v395 = vrot.slane %v267, %v394
        %vm396 = vcmask 195584
        %v398 = vsel %vm396, %v388, 0
        %400 = vmatprep.subr.mxu0 0.0
        %401 = vmatpush1.msra.mxu0 0.0
        %402 = vmatprep.subr.mxu0 0.0
        %403 = vmatpush1.msra.mxu0 0.0
        %404 = vmatprep.subr.mxu0 0.0
        %405 = vmatpush1.msra.mxu0 0.0
        %406 = vmatprep.subr.mxu0 0.0
        %407 = vmatpush1.msra.mxu0 0.0
        %408 = vmatprep.subr.mxu0 0.0
        %409 = vmatpush1.msra.mxu0 0.0
        %410 = vmatprep.subr.mxu0 0.0
        %411 = vmatpush1.msra.mxu0 0.0
        %412 = vmatprep.subr.mxu0 0.0
        %413 = vmatpush1.msra.mxu0 0.0
        %414 = vmatprep.subr.mxu0 0.0
        %415 = vmatpush1.msra.mxu0 0.0
        %416 = vmatprep.subr.mxu0 0.0
        %417 = vmatpush1.msra.mxu0 0.0
        %418 = vmatprep.subr.mxu0 0.0
        %419 = vmatpush1.msra.mxu0 0.0
        %420 = vmatprep.subr.mxu0 0.0
        %421 = vmatpush1.msra.mxu0 0.0
        %422 = vmatprep.subr.mxu0 0.0
        %423 = vmatpush1.msra.mxu0 0.0
        %424 = vmatprep.subr.mxu0 0.0
        %425 = vmatpush1.msra.mxu0 0.0
        %426 = vmatprep.subr.mxu0 0.0
        %427 = vmatpush1.msra.mxu0 %v391
        %428 = vmatprep.subr.mxu0 0.0
        %429 = vmatpush1.msra.mxu0 %v390
        %430 = vmatprep.subr.mxu0 0.0
        %431 = vmatpush1.msra.mxu0 %v389
        %432 = vmatprep.subr.mxu0 0.0
        %433 = vmatpush2.msra.mxu0 0.0
        %434 = vmatprep.subr.mxu0 0.0
        %435 = vmatpush2.msra.mxu0 0.0
        %436 = vmatprep.subr.mxu0 0.0
        %437 = vmatpush2.msra.mxu0 0.0
        %438 = vmatprep.subr.mxu0 0.0
        %439 = vmatpush2.msra.mxu0 0.0
        %440 = vmatprep.subr.mxu0 0.0
        %441 = vmatpush2.msra.mxu0 0.0
        %442 = vmatprep.subr.mxu0 0.0
        %443 = vmatpush2.msra.mxu0 0.0
        %444 = vmatprep.subr.mxu0 0.0
        %445 = vmatpush2.msra.mxu0 0.0
        %446 = vmatprep.subr.mxu0 0.0
        %447 = vmatpush2.msra.mxu0 0.0
        %448 = vmatprep.subr.mxu0 0.0
        %449 = vmatpush2.msra.mxu0 0.0
        %450 = vmatprep.subr.mxu0 0.0
        %451 = vmatpush2.msra.mxu0 0.0
        %452 = vmatprep.subr.mxu0 0.0
        %453 = vmatpush2.msra.mxu0 0.0
        %454 = vmatprep.subr.mxu0 0.0
        %455 = vmatpush2.msra.mxu0 0.0
        %456 = vmatprep.subr.mxu0 0.0
        %457 = vmatpush2.msra.mxu0 0.0
        %458 = vmatprep.subr.mxu0 0.0
        %459 = vmatpush2.msra.mxu0 0.0
        %460 = vmatprep.subr.mxu0 0.0
        %461 = vmatpush2.msra.mxu0 0.0
        %462 = vmatprep.subr.mxu0 0.0
        %463 = vmatpush2.msra.mxu0 0.0
        %464 = vmatprep.mubr.f32.mxu0 0.0
        %465 = vmatmul.mubr.f32.gmra.mxu0 %v398
        %v466 = vpop.f32.mrf.mxu0
        %v467 = vadd.f32 %v395, %v466
        %v468 = vpop.f32.mrf.mxu0
        %469 = vdwg.mxu0
        %v470 = vmax.f32 %v467, 0.0
        %v471 = vld [vmem:[%s3] sm:$0xf]
        %v472 = vlaneseq
        %v473 = vshrl.u32 %v472, 7
        %v474 = vsub.s32 0, %v473
        %v475 = vrot.slane %v268, %v474
        %v477 = vsel %vm256, %v261, 0
        %v480 = vsel %vm296, %v471, 0
        %482 = vmatprep.subr.mxu0 0.0
        %483 = vmatpush1.msra.mxu0 0.0
        %484 = vmatprep.subr.mxu0 0.0
        %485 = vmatpush1.msra.mxu0 0.0
        %486 = vmatprep.subr.mxu0 0.0
        %487 = vmatpush1.msra.mxu0 0.0
        %488 = vmatprep.subr.mxu0 0.0
        %489 = vmatpush1.msra.mxu0 0.0
        %490 = vmatprep.subr.mxu0 0.0
        %491 = vmatpush1.msra.mxu0 0.0
        %492 = vmatprep.subr.mxu0 0.0
        %493 = vmatpush1.msra.mxu0 0.0
        %494 = vmatprep.subr.mxu0 0.0
        %495 = vmatpush1.msra.mxu0 0.0
        %496 = vmatprep.subr.mxu0 0.0
        %497 = vmatpush1.msra.mxu0 0.0
        %498 = vmatprep.subr.mxu0 0.0
        %499 = vmatpush1.msra.mxu0 0.0
        %500 = vmatprep.subr.mxu0 0.0
        %501 = vmatpush1.msra.mxu0 0.0
        %502 = vmatprep.subr.mxu0 0.0
        %503 = vmatpush1.msra.mxu0 0.0
        %504 = vmatprep.subr.mxu0 0.0
        %505 = vmatpush1.msra.mxu0 0.0
        %506 = vmatprep.subr.mxu0 0.0
        %507 = vmatpush1.msra.mxu0 0.0
        %508 = vmatprep.subr.mxu0 0.0
        %509 = vmatpush1.msra.mxu0 0.0
        %510 = vmatprep.subr.mxu0 0.0
        %511 = vmatpush1.msra.mxu0 0.0
        %512 = vmatprep.subr.mxu0 0.0
        %513 = vmatpush1.msra.mxu0 %v480
        %514 = vmatprep.subr.mxu0 0.0
        %515 = vmatpush2.msra.mxu0 0.0
        %516 = vmatprep.subr.mxu0 0.0
        %517 = vmatpush2.msra.mxu0 0.0
        %518 = vmatprep.subr.mxu0 0.0
        %519 = vmatpush2.msra.mxu0 0.0
        %520 = vmatprep.subr.mxu0 0.0
        %521 = vmatpush2.msra.mxu0 0.0
        %522 = vmatprep.subr.mxu0 0.0
        %523 = vmatpush2.msra.mxu0 0.0
        %524 = vmatprep.subr.mxu0 0.0
        %525 = vmatpush2.msra.mxu0 0.0
        %526 = vmatprep.subr.mxu0 0.0
        %527 = vmatpush2.msra.mxu0 0.0
        %528 = vmatprep.subr.mxu0 0.0
        %529 = vmatpush2.msra.mxu0 0.0
        %530 = vmatprep.subr.mxu0 0.0
        %531 = vmatpush2.msra.mxu0 0.0
        %532 = vmatprep.subr.mxu0 0.0
        %533 = vmatpush2.msra.mxu0 0.0
        %534 = vmatprep.subr.mxu0 0.0
        %535 = vmatpush2.msra.mxu0 0.0
        %536 = vmatprep.subr.mxu0 0.0
        %537 = vmatpush2.msra.mxu0 0.0
        %538 = vmatprep.subr.mxu0 0.0
        %539 = vmatpush2.msra.mxu0 0.0
        %540 = vmatprep.subr.mxu0 0.0
        %541 = vmatpush2.msra.mxu0 0.0
        %542 = vmatprep.subr.mxu0 0.0
        %543 = vmatpush2.msra.mxu0 0.0
        %544 = vmatprep.subr.mxu0 0.0
        %545 = vmatpush2.msra.mxu0 0.0
        %546 = vmatprep.mubr.f32.mxu0 0.0
        %547 = vmatmul.mubr.f32.gmra.mxu0 %v477
        %v548 = vpop.f32.mrf.mxu0
        %v549 = vadd.f32 %v475, %v548
        %v550 = vpop.f32.mrf.mxu0
        %551 = vdwg.mxu0
        %v552 = vadd.f32 %v470, %v549
        %553 = vxpose.xlu0.b32.start [1/16] %v552, 128
        %554 = vxpose.xlu0.b32.cont [2/16] 0.0, 128
        %555 = vxpose.xlu0.b32.cont [3/16] 0.0, 128
        %556 = vxpose.xlu0.b32.cont [4/16] 0.0, 128
        %557 = vxpose.xlu0.b32.cont [5/16] 0.0, 128
        %558 = vxpose.xlu0.b32.cont [6/16] 0.0, 128
        %559 = vxpose.xlu0.b32.cont [7/16] 0.0, 128
        %560 = vxpose.xlu0.b32.cont [8/16] 0.0, 128
        %561 = vxpose.xlu0.b32.cont [9/16] 0.0, 128
        %562 = vxpose.xlu0.b32.cont [10/16] 0.0, 128
        %563 = vxpose.xlu0.b32.cont [11/16] 0.0, 128
        %564 = vxpose.xlu0.b32.cont [12/16] 0.0, 128
        %565 = vxpose.xlu0.b32.cont [13/16] 0.0, 128
        %566 = vxpose.xlu0.b32.cont [14/16] 0.0, 128
        %567 = vxpose.xlu0.b32.cont [15/16] 0.0, 128
        %568 = vxpose.xlu0.b32.end [16/16] 0.0, 128
        %v569 = vpop.trf.xlu0
        %v570 = vpop.trf.xlu0
        %v571 = vpop.trf.xlu0
        %v572 = vpop.trf.xlu0
        %v573 = vpop.trf.xlu0
        %v574 = vpop.trf.xlu0
        %v575 = vpop.trf.xlu0
        %v576 = vpop.trf.xlu0
        %v577 = vpop.trf.xlu0
        %v578 = vpop.trf.xlu0
        %v579 = vpop.trf.xlu0
        %v580 = vpop.trf.xlu0
        %v581 = vpop.trf.xlu0
        %v582 = vpop.trf.xlu0
        %v583 = vpop.trf.xlu0
        %v584 = vpop.trf.xlu0
        %vm585 = vcmask 64512
        %586 = vst.msk [vmem:[%s215] sm:$0xff] %vm585, %v569
        %s587 = sand.u32 %s137, 1
        %s588 = scalar_lea.sflag [#allocation6], %s587
        %s589 = sand.u32 %s137, 1
        %s590 = smul.addr %s589, 8
        %s591 = scalar_lea.vmem [#allocation5], %s590
        // Predicated region
        $region41: #{tpu_custom_call.1} parent=39 // pred_check
          %p592 = pneg %p147
        $region42: #{tpu_custom_call.1} parent=39 // pred_check_branch
          %594 = sbr.rel (%p592) target = $region44
        $region43: #{tpu_custom_call.1} parent=39 // pred_region
          %s596 = ssub.s32 128, 128
          %597 = vsyncadd %s588, %s596
          %s598 = smul.addr %s19, 128
          %s599 = scalar_lea.hbm %s5, %s598
          %s601 = sshll.u32 %s591, 4
          %s602 = int_to_ptr.vmem [resolvable:$true] %s601
          %604 = dma.vmem_to_hbm [thread:$0]  %s602, 128, %s599, %s588
        $region44: #{tpu_custom_call.1} parent=39 // pred_fallthru
          _
      $region40: #{tpu_custom_call.1} parent=5 // pred_fallthru
        _
      %p605 = scmp.le.s32.totalorder 2, %s14
      // Predicated region
      $region45: #{tpu_custom_call.1} parent=5 // pred_check
        %p606 = pneg %p605
      $region46: #{tpu_custom_call.1} parent=5 // pred_check_branch
        %608 = sbr.rel (%p606) target = $region48
      $region47: #{tpu_custom_call.1} parent=5 // pred_region
        %s609 = ssub.s32 %s14, 2
        // Predicated region
        $region49: #{tpu_custom_call.1} parent=47 // pred_check
          %p610 = pneg %p153
        $region50: #{tpu_custom_call.1} parent=47 // pred_check_branch
          %612 = sbr.rel (%p610) target = $region52
        $region51: #{tpu_custom_call.1} parent=47 // pred_region
          %s613 = sand.u32 %s138, 1
          %s614 = scalar_lea.sflag [#allocation6], %s613
          %s615 = sand.u32 %s138, 1
          %s616 = smul.addr %s615, 8
          %s617 = scalar_lea.vmem [#allocation5], %s616
          %618 = dma.done %s614, 128
        $region52: #{tpu_custom_call.1} parent=47 // pred_fallthru
          _
      $region48: #{tpu_custom_call.1} parent=5 // pred_fallthru
        _
    $region6: #{tpu_custom_call.1} parent=1 // loop_footer
      %s18 = sadd.s32 1, %s14
    $region7: #{tpu_custom_call.1} parent=1 // loop_footer_branch
      %13 = sbr.rel target = $region3
    $region8: #{tpu_custom_call.1} parent=1 // loop_exit
      _
    %619 = vsyncpa [#allocation6], 1
    %s620 = scalar_lea.sflag [#allocation6], 1
    %621 = vsyncpa %s620, 1

</llo_original>
